<compile_context>
chip_gen: v7x
topology: tpu7x:2x2x1
jax: 0.10.0
libtpu: 0.0.40
codegen_flags: <defaults>
</compile_context>

<pallas_src>
import jax
import jax.numpy as jnp
from jax.experimental import pallas as pl
from jax.experimental.pallas import tpu as pltpu

# SELU constants (match torch.nn.functional.selu)
_SELU_ALPHA = 1.6732632423543772848170429916717
_SELU_SCALE = 1.0507009873554804934193349852946

# Per-step pipelined VMEM budget: 3 arrays (a, b, out) x 2 buffers x block.
# Kept comfortably under v5e's 16 MiB default scoped VMEM and well under
# v7x's 64 MiB physical VMEM, while still large enough (>=512-wide lane-dense
# blocks) to sit near the HBM roofline on all generations.
_VMEM_BUDGET_BYTES = 12 * 1024 * 1024


def _seglu_kernel(a_ref, b_ref, o_ref):
    a = a_ref[...].astype(jnp.float32)
    b = b_ref[...].astype(jnp.float32)
    # SELU(b) = scale * (b if b > 0 else alpha * (exp(b) - 1))
    # exp(min(b, 0)) avoids computing exp of large positives on the unselected
    # branch (would overflow to inf; harmless but unnecessary).
    selu_b = _SELU_SCALE * jnp.where(
        b > 0.0, b, _SELU_ALPHA * (jnp.exp(jnp.minimum(b, 0.0)) - 1.0)
    )
    o_ref[...] = (a * selu_b).astype(o_ref.dtype)


def _pick_col_tile(half: int) -> int:
    """Largest multiple of 128 that divides `half` and is <= 1024."""
    best = 128
    c = 128
    cap = min(half, 1024)
    while c <= cap:
        if half % c == 0:
            best = c
        c += 128
    return best


def _pick_row_tile(rows: int, tile_c: int, itemsize: int) -> int:
    if rows < 8:
        return rows  # full-extent block along rows (always legal)
    budget_elems = _VMEM_BUDGET_BYTES // (6 * itemsize)
    tile_r = max(8, min(512, budget_elems // max(tile_c, 1)))
    tile_r = (tile_r // 8) * 8
    rows_up = ((rows + 7) // 8) * 8
    return min(tile_r, rows_up)


def seglu(x: jax.Array) -> jax.Array:
    """SeGLU: split last dim in half, return a * SELU(b)."""
    assert x.shape[-1] % 2 == 0, "last dimension must be even"
    half = x.shape[-1] // 2
    lead_shape = x.shape[:-1]
    rows = 1
    for d in lead_shape:
        rows *= d
    itemsize = jnp.dtype(x.dtype).itemsize

    out_shape = jax.ShapeDtypeStruct((rows, half), x.dtype)
    cost = pl.CostEstimate(
        flops=3 * rows * half,
        transcendentals=rows * half,
        bytes_accessed=3 * rows * half * itemsize,
    )

    if half % 128 == 0:
        # ---- Fast path: feed both halves straight from the fused array. ----
        x2 = x.reshape(rows, 2 * half)
        tile_c = _pick_col_tile(half)
        tile_r = _pick_row_tile(rows, tile_c, itemsize)
        ncols = half // tile_c
        grid = (pl.cdiv(rows, tile_r), ncols)

        out2 = pl.pallas_call(
            _seglu_kernel,
            out_shape=out_shape,
            grid_spec=pltpu.PrefetchScalarGridSpec(
                num_scalar_prefetch=0,
                grid=grid,
                in_specs=[
                    # a = x[:, :half], column-block j
                    pl.BlockSpec((tile_r, tile_c), lambda i, j: (i, j)),
                    # b = x[:, half:], column-block j + ncols (same array!)
                    pl.BlockSpec((tile_r, tile_c), lambda i, j: (i, j + ncols)),
                ],
                out_specs=pl.BlockSpec((tile_r, tile_c), lambda i, j: (i, j)),
            ),
            compiler_params=pltpu.CompilerParams(
                dimension_semantics=("parallel", "parallel"),
            ),
            cost_estimate=cost,
        )(x2, x2)
    else:
        # ---- Fallback: half not a multiple of 128. Slice a/b in JAX; the
        # full-width block (last dim == full array dim) is always legal. ----
        a2 = x[..., :half].reshape(rows, half)
        b2 = x[..., half:].reshape(rows, half)
        if rows < 8:
            tile_r = rows
        else:
            budget_elems = _VMEM_BUDGET_BYTES // (6 * itemsize)
            tile_r = max(8, min(512, budget_elems // max(half, 1)))
            tile_r = max(8, (tile_r // 8) * 8)
            rows_up = ((rows + 7) // 8) * 8
            tile_r = min(tile_r, rows_up)
        grid = (pl.cdiv(rows, tile_r),)

        out2 = pl.pallas_call(
            _seglu_kernel,
            out_shape=out_shape,
            grid_spec=pltpu.PrefetchScalarGridSpec(
                num_scalar_prefetch=0,
                grid=grid,
                in_specs=[
                    pl.BlockSpec((tile_r, half), lambda i: (i, 0)),
                    pl.BlockSpec((tile_r, half), lambda i: (i, 0)),
                ],
                out_specs=pl.BlockSpec((tile_r, half), lambda i: (i, 0)),
            ),
            compiler_params=pltpu.CompilerParams(
                dimension_semantics=("parallel",),
            ),
            cost_estimate=cost,
        )(a2, b2)

    return out2.reshape(*lead_shape, half)


def _seglu_ref(x: jax.Array) -> jax.Array:
    half = x.shape[-1] // 2
    a, b = x[..., :half], x[..., half:]
    return a * (_SELU_SCALE * jnp.where(b > 0, b, _SELU_ALPHA * (jnp.exp(b) - 1.0)))


if __name__ == "__main__":
    key = jax.random.PRNGKey(0)
    k1, k2 = jax.random.split(key)

    # Small shape consistent with the module's (3, 20, 20)-style usage:
    # exercises the fallback path (half = 16, not a multiple of 128).
    x_small = jax.random.normal(k1, (2, 8, 32), dtype=jnp.float32)
    out_small = jax.block_until_ready(seglu(x_small))
    assert out_small.shape == (2, 8, 16), out_small.shape
    assert jnp.allclose(out_small, _seglu_ref(x_small), atol=1e-5, rtol=1e-5), \
        "mismatch vs reference (fallback path)"

    # 128-aligned hidden size: exercises the fused fast path (no a/b copies).
    x_aligned = jax.random.normal(k2, (2, 8, 256), dtype=jnp.float32)
    out_aligned = jax.block_until_ready(seglu(x_aligned))
    assert out_aligned.shape == (2, 8, 128), out_aligned.shape
    assert jnp.allclose(out_aligned, _seglu_ref(x_aligned), atol=1e-5, rtol=1e-5), \
        "mismatch vs reference (fast path)"

    print("KERNEL_OK")
</pallas_src>

<mosaic_0001>
module attributes {stable_mosaic.version = 11 : i64} {
  func.func @_seglu_kernel(%arg0: i32, %arg1: memref<16x16xf32, #tpu.memory_space<vmem>>, %arg2: memref<16x16xf32, #tpu.memory_space<vmem>>, %arg3: memref<16x16xf32, #tpu.memory_space<vmem>>) attributes {dimension_semantics = [#tpu.dimension_semantics<parallel>], iteration_bounds = array<i64: 1>, scalar_prefetch = 0 : i64, scratch_operands = 0 : i64, tpu.core_type = #tpu.core_type<tc>, window_params = [{transform_indices = @transform_0, window_bounds = array<i64: 16, 16>}, {transform_indices = @transform_1, window_bounds = array<i64: 16, 16>}, {transform_indices = @transform_2, window_bounds = array<i64: 16, 16>}]} {
    %c0 = arith.constant 0 : index
    %c0_0 = arith.constant 0 : index
    %0 = vector.load %arg1[%c0, %c0_0] : memref<16x16xf32, #tpu.memory_space<vmem>>, vector<16x16xf32>
    %c0_1 = arith.constant 0 : index
    %c0_2 = arith.constant 0 : index
    %1 = vector.load %arg2[%c0_1, %c0_2] : memref<16x16xf32, #tpu.memory_space<vmem>>, vector<16x16xf32>
    %cst = arith.constant 0.000000e+00 : f32
    %2 = vector.broadcast %cst : f32 to vector<16x16xf32>
    %3 = arith.cmpf ogt, %1, %2 : vector<16x16xf32>
    %cst_3 = arith.constant 0.000000e+00 : f32
    %4 = vector.broadcast %cst_3 : f32 to vector<16x16xf32>
    %5 = arith.minimumf %1, %4 : vector<16x16xf32>
    %6 = math.exp %5 : vector<16x16xf32>
    %cst_4 = arith.constant 1.000000e+00 : f32
    %7 = vector.broadcast %cst_4 : f32 to vector<16x16xf32>
    %8 = arith.subf %6, %7 : vector<16x16xf32>
    %cst_5 = arith.constant 1.67326319 : f32
    %9 = vector.broadcast %cst_5 : f32 to vector<16x16xf32>
    %10 = arith.mulf %9, %8 : vector<16x16xf32>
    %11 = arith.select %3, %1, %10 : vector<16x16xi1>, vector<16x16xf32>
    %cst_6 = arith.constant 1.05070102 : f32
    %12 = vector.broadcast %cst_6 : f32 to vector<16x16xf32>
    %13 = arith.mulf %12, %11 : vector<16x16xf32>
    %14 = arith.mulf %0, %13 : vector<16x16xf32>
    %c0_7 = arith.constant 0 : index
    %c0_8 = arith.constant 0 : index
    %15 = vector.load %arg3[%c0_7, %c0_8] : memref<16x16xf32, #tpu.memory_space<vmem>>, vector<16x16xf32>
    tpu.vector_store %arg3[%c0_7, %c0_8], %14 {strides = array<i32>} : memref<16x16xf32, #tpu.memory_space<vmem>>, vector<16x16xf32>,
    return
  }
  func.func @transform_0(%arg0: i32) -> (i32, i32) {
    %c0_i32 = arith.constant 0 : i32
    %c0_i32_0 = arith.constant 0 : i32
    return %arg0, %c0_i32 : i32, i32
  }
  func.func @transform_1(%arg0: i32) -> (i32, i32) {
    %c0_i32 = arith.constant 0 : i32
    %c0_i32_0 = arith.constant 0 : i32
    return %arg0, %c0_i32 : i32, i32
  }
  func.func @transform_2(%arg0: i32) -> (i32, i32) {
    %c0_i32 = arith.constant 0 : i32
    %c0_i32_0 = arith.constant 0 : i32
    return %arg0, %c0_i32 : i32, i32
  }
}

</mosaic_0001>

<llo_original>
// kernel: tpu_custom_call.1
$region0: #{tpu_custom_call.1}
  #allocation0 [shape = 'u32[]', space=smem, size = 0x4, offset = 0x4, fixed_abs, tag = 'smem constant byte address 0x4 - core index']
  #allocation1 [shape = 'u32[144,128]{1,0:T(1,128)}', space=vmem, size = 0x12000, scoped, tag = 'internal scratch']
  %s0 = inlined_call_operand.hbm [shape: f32[16,16], index: 0, kind: input, shape index: {}]
  %s1 = inlined_call_operand.hbm [shape: f32[16,16], index: 1, kind: input, shape index: {}]
  %s2 = inlined_call_operand.hbm [shape: f32[16,16], index: 2, kind: output, shape index: {}]
  %s3 = sld [smem:[#allocation0]]
  $region26: #{tpu_custom_call.1} parent=0
    _
  %s5 = ssub.s32 1, %s3
  %s6 = scalar_select 0, %s5, %s3
  $region1: #{tpu_custom_call.1} parent=0
    #allocation2 [shape = 'u8[8192]{0}', space=vmem, size = 0x2000, scoped, tag = 'input window, operand 0, single buffered']
    #allocation3 [shape = 's32[1]{0}', space=sflag, size = 0x4, scoped, tag = 'scoped memory for tpu_custom_call.1']
    #allocation4 [shape = 's32[1]{0}', space=sflag, size = 0x4, scoped, tag = 'scoped memory for tpu_custom_call.1']
    #allocation5 [shape = 'u8[8192]{0}', space=vmem, size = 0x2000, scoped, tag = 'input window, operand 1, single buffered']
    #allocation6 [shape = 's32[1]{0}', space=sflag, size = 0x4, scoped, tag = 'scoped memory for tpu_custom_call.1']
    #allocation7 [shape = 'u8[8192]{0}', space=vmem, size = 0x2000, scoped, tag = 'output window, operand 0, single buffered']
    %7 = vsyncpa [#allocation3], 0
    %8 = vsyncpa [#allocation6], 0
    %9 = vsyncpa [#allocation4], 0
    // Predicated region
    $region2: #{tpu_custom_call.1} parent=1 // pred_check
      _
    $region3: #{tpu_custom_call.1} parent=1 // pred_check_branch
      %11 = sbr.rel (0) target = $region5
    $region4: #{tpu_custom_call.1} parent=1 // pred_region
      %s13 = ssub.s32 256, 256
      %14 = vsyncadd [#allocation3], %s13
      %s15 = sshll.u32 [#allocation2], 4
      %s16 = int_to_ptr.vmem [resolvable:$true] %s15
      %21 = dma.hbm_to_vmem [thread:$0]  %s0, 256, %s16, [#allocation3], 128, 128, 8
    $region5: #{tpu_custom_call.1} parent=1 // pred_fallthru
      _
    // Predicated region
    $region6: #{tpu_custom_call.1} parent=1 // pred_check
      _
    $region7: #{tpu_custom_call.1} parent=1 // pred_check_branch
      %23 = sbr.rel (0) target = $region9
    $region8: #{tpu_custom_call.1} parent=1 // pred_region
      %s25 = ssub.s32 256, 256
      %26 = vsyncadd [#allocation6], %s25
      %s27 = sshll.u32 [#allocation5], 4
      %s28 = int_to_ptr.vmem [resolvable:$true] %s27
      %33 = dma.hbm_to_vmem [thread:$0]  %s1, 256, %s28, [#allocation6], 128, 128, 8
    $region9: #{tpu_custom_call.1} parent=1 // pred_fallthru
      _
    // Predicated region
    $region10: #{tpu_custom_call.1} parent=1 // pred_check
      _
    $region11: #{tpu_custom_call.1} parent=1 // pred_check_branch
      %35 = sbr.rel (0) target = $region13
    $region12: #{tpu_custom_call.1} parent=1 // pred_region
      %36 = dma.done [#allocation3], 256
    $region13: #{tpu_custom_call.1} parent=1 // pred_fallthru
      _
    // Predicated region
    $region14: #{tpu_custom_call.1} parent=1 // pred_check
      _
    $region15: #{tpu_custom_call.1} parent=1 // pred_check_branch
      %38 = sbr.rel (0) target = $region17
    $region16: #{tpu_custom_call.1} parent=1 // pred_region
      %39 = dma.done [#allocation6], 256
    $region17: #{tpu_custom_call.1} parent=1 // pred_fallthru
      _
    %v40 = vld [vmem:[#allocation2] sm:$0xff]
    %v41 = vld [vmem:[#allocation2 + $0x8] sm:$0xff]
    %v42 = vld [vmem:[#allocation5] sm:$0xff]
    %v43 = vld [vmem:[#allocation5 + $0x8] sm:$0xff]
    %vm44 = vcmp.gt.f32.partialorder %v42, 0.0
    %vm45 = vcmp.gt.f32.partialorder %v43, 0.0
    %v46 = vmin.f32 %v42, 0.0
    %v47 = vmin.f32 %v43, 0.0
    %v48 = vmul.f32 %v46, 1.442695
    %v49 = vpow.pop %v48
    %v50 = vmul.f32 %v47, 1.442695
    %v51 = vpow.pop %v50
    %v52 = vsub.f32 %v49, 1.0
    %v53 = vsub.f32 %v51, 1.0
    %v54 = vmul.f32 %v52, 1.6732632
    %v55 = vmul.f32 %v53, 1.6732632
    %v56 = vsel %vm44, %v42, %v54
    %v57 = vsel %vm45, %v43, %v55
    %v58 = vmul.f32 %v56, 1.050701
    %v59 = vmul.f32 %v57, 1.050701
    %v60 = vmul.f32 %v40, %v58
    %v61 = vmul.f32 %v41, %v59
    %vm62 = vcmask 130048
    %63 = vst.msk [vmem:[#allocation7] sm:$0xff] %vm62, %v60
    %64 = vst.msk [vmem:[#allocation7 + $0x8] sm:$0xff] %vm62, %v61
    // Predicated region
    $region18: #{tpu_custom_call.1} parent=1 // pred_check
      _
    $region19: #{tpu_custom_call.1} parent=1 // pred_check_branch
      %66 = sbr.rel (0) target = $region21
    $region20: #{tpu_custom_call.1} parent=1 // pred_region
      %s68 = ssub.s32 256, 256
      %69 = vsyncadd [#allocation4], %s68
      %s70 = sshll.u32 [#allocation7], 4
      %s71 = int_to_ptr.vmem [resolvable:$true] %s70
      %76 = dma.vmem_to_hbm [thread:$0]  %s71, 256, %s2, [#allocation4], 128, 128, 8
    $region21: #{tpu_custom_call.1} parent=1 // pred_fallthru
      _
    // Predicated region
    $region22: #{tpu_custom_call.1} parent=1 // pred_check
      _
    $region23: #{tpu_custom_call.1} parent=1 // pred_check_branch
      %78 = sbr.rel (0) target = $region25
    $region24: #{tpu_custom_call.1} parent=1 // pred_region
      %79 = dma.done [#allocation4], 256
    $region25: #{tpu_custom_call.1} parent=1 // pred_fallthru
      _
    %80 = vsyncpa [#allocation3], 1
    %81 = vsyncpa [#allocation6], 1
    %82 = vsyncpa [#allocation4], 1

</llo_original>
